<compile_context>
chip_gen: v6e
topology: v6e:2x2x1
jax: 0.10.0
libtpu: 0.0.40
codegen_flags: <defaults>
</compile_context>

<pallas_src>
import functools

import jax
import jax.numpy as jnp
from jax.experimental import pallas as pl
from jax.experimental.pallas import tpu as pltpu

_LANE = 128    # lane width (last dim)
_SUBLANE = 8   # f32 sublane width (second-to-last dim)


def _round_up(x, m):
    return ((x + m - 1) // m) * m


def _pad2d(x, rows, cols):
    r, c = x.shape
    if r == rows and c == cols:
        return x
    return jnp.pad(x, ((0, rows - r), (0, cols - c)))


def _mlp3(obs_ref, w1_ref, b1_ref, w2_ref, b2_ref, w3_ref, b3_ref, compute_dtype):
    """3-layer MLP: f32 accumulation in the MXU, f32 bias add / ReLU on the VPU."""
    x = obs_ref[...].astype(compute_dtype)
    h1 = jnp.dot(x, w1_ref[...], preferred_element_type=jnp.float32) + b1_ref[...]
    h1 = jnp.maximum(h1, 0.0).astype(compute_dtype)
    h2 = jnp.dot(h1, w2_ref[...], preferred_element_type=jnp.float32) + b2_ref[...]
    h2 = jnp.maximum(h2, 0.0).astype(compute_dtype)
    return jnp.dot(h2, w3_ref[...], preferred_element_type=jnp.float32) + b3_ref[...]


def _actor_kernel_masked(obs_ref, legal_ref, w1_ref, b1_ref, w2_ref, b2_ref,
                         w3_ref, b3_ref, out_ref, *, compute_dtype):
    logits = _mlp3(obs_ref, w1_ref, b1_ref, w2_ref, b2_ref, w3_ref, b3_ref,
                   compute_dtype)
    # legal-action mask add in f32 so the -1e9 magnitude is preserved.
    out_ref[...] = (logits + legal_ref[...].astype(jnp.float32)).astype(out_ref.dtype)


def _actor_kernel_plain(obs_ref, w1_ref, b1_ref, w2_ref, b2_ref,
                        w3_ref, b3_ref, out_ref, *, compute_dtype):
    logits = _mlp3(obs_ref, w1_ref, b1_ref, w2_ref, b2_ref, w3_ref, b3_ref,
                   compute_dtype)
    out_ref[...] = logits.astype(out_ref.dtype)


def actor_forward(obs, legal_actions, params, *, mean=False, tile_b=128,
                  compute_dtype=jnp.float32):
    """Fused Actor forward.

    params: dict with w1,b1,w2,b2,w3,b3; weights stored [in, out], biases [1, out].
    compute_dtype: dtype fed to the MXU (f32 or bf16); accumulation is always f32.
    """
    w1, b1 = params["w1"], params["b1"]
    w2, b2 = params["w2"], params["b2"]
    w3, b3 = params["w3"], params["b3"]

    B, D0 = obs.shape
    D1 = w1.shape[1]
    D2 = w2.shape[1]
    A = w3.shape[1]
    if not mean:
        assert legal_actions.shape == (B, A)

    # Lane-dense padding of every feature dim (zero-padding is exact for this MLP:
    # padded K-rows contribute 0, padded hidden columns stay 0 through ReLU, padded
    # output columns are sliced away).
    D0p = _round_up(D0, _LANE)
    D1p = _round_up(D1, _LANE)
    D2p = _round_up(D2, _LANE)
    Ap = _round_up(A, _LANE)

    # Batch tiling: clamp the requested tile to the (sublane-rounded) batch so small
    # batches run in a single grid step, large batches keep many parallel steps.
    tile_b = max(_SUBLANE, _round_up(min(tile_b, _round_up(B, _SUBLANE)), _SUBLANE))
    Bp = _round_up(B, tile_b)
    grid = (Bp // tile_b,)

    f32 = jnp.float32
    obs_p = _pad2d(obs.astype(f32), Bp, D0p)
    w1_p = _pad2d(w1.astype(f32), D0p, D1p).astype(compute_dtype)
    w2_p = _pad2d(w2.astype(f32), D1p, D2p).astype(compute_dtype)
    w3_p = _pad2d(w3.astype(f32), D2p, Ap).astype(compute_dtype)
    b1_p = _pad2d(b1.astype(f32), 1, D1p)
    b2_p = _pad2d(b2.astype(f32), 1, D2p)
    b3_p = _pad2d(b3.astype(f32), 1, Ap)

    weight_specs = [
        pl.BlockSpec((D0p, D1p), lambda i: (0, 0)),   # W1 (resident)
        pl.BlockSpec((1, D1p), lambda i: (0, 0)),     # b1
        pl.BlockSpec((D1p, D2p), lambda i: (0, 0)),   # W2
        pl.BlockSpec((1, D2p), lambda i: (0, 0)),     # b2
        pl.BlockSpec((D2p, Ap), lambda i: (0, 0)),    # W3
        pl.BlockSpec((1, Ap), lambda i: (0, 0)),      # b3
    ]
    obs_spec = pl.BlockSpec((tile_b, D0p), lambda i: (i, 0))
    out_spec = pl.BlockSpec((tile_b, Ap), lambda i: (i, 0))

    if mean:
        # No legal_actions input at all: no dead DMA / VMEM double-buffer.
        kernel = functools.partial(_actor_kernel_plain, compute_dtype=compute_dtype)
        in_specs = [obs_spec] + weight_specs
        args = (obs_p, w1_p, b1_p, w2_p, b2_p, w3_p, b3_p)
    else:
        legal_p = _pad2d(legal_actions.astype(f32), Bp, Ap)
        kernel = functools.partial(_actor_kernel_masked, compute_dtype=compute_dtype)
        in_specs = [obs_spec, pl.BlockSpec((tile_b, Ap), lambda i: (i, 0))] + weight_specs
        args = (obs_p, legal_p, w1_p, b1_p, w2_p, b2_p, w3_p, b3_p)

    # Advisory cost estimate for XLA scheduling of the custom call.
    flops = 2 * Bp * (D0p * D1p + D1p * D2p + D2p * Ap)
    bytes_accessed = int(sum(int(a.size) * a.dtype.itemsize for a in args) + Bp * Ap * 4)
    cost = pl.CostEstimate(flops=int(flops), transcendentals=0,
                           bytes_accessed=bytes_accessed)

    # Explicit VMEM budget: weights/biases resident (double-buffered by default),
    # batch-tiled inputs/outputs double-buffered, plus intermediate activations.
    cbytes = jnp.dtype(compute_dtype).itemsize
    weight_bytes = 2 * cbytes * (D0p * D1p + D1p * D2p + D2p * Ap) \
        + 2 * 4 * (D1p + D2p + Ap)
    tile_bytes = 2 * 4 * tile_b * (D0p + 2 * Ap) + 4 * tile_b * (D1p + D2p + Ap)
    vmem_limit = int(min(max(2 * (weight_bytes + tile_bytes), 32 * 1024 * 1024),
                         64 * 1024 * 1024))

    out_padded = pl.pallas_call(
        kernel,
        out_shape=jax.ShapeDtypeStruct((Bp, Ap), jnp.float32),
        grid_spec=pltpu.PrefetchScalarGridSpec(
            num_scalar_prefetch=0,
            grid=grid,
            in_specs=in_specs,
            out_specs=out_spec,
        ),
        compiler_params=pltpu.CompilerParams(
            dimension_semantics=("parallel",),
            vmem_limit_bytes=vmem_limit,
        ),
        cost_estimate=cost,
    )(*args)

    return out_padded[:B, :A]


def init_actor_params(key, mlp_layers, action_num):
    """Deterministic synthetic init (mimics nn.Linear shapes, stored as [in, out])."""
    d0, d1, d2 = mlp_layers
    dims = [(d0, d1), (d1, d2), (d2, action_num)]
    params = {}
    for idx, (din, dout) in enumerate(dims, start=1):
        key, kw, kb = jax.random.split(key, 3)
        bound = 1.0 / jnp.sqrt(din)
        # PyTorch nn.Linear default: U(-1/sqrt(in), 1/sqrt(in)); weight stored [out,in],
        # we store the transpose [in,out] so the kernel computes x @ W directly.
        params[f"w{idx}"] = jax.random.uniform(
            kw, (din, dout), jnp.float32, minval=-bound, maxval=bound)
        params[f"b{idx}"] = jax.random.uniform(
            kb, (1, dout), jnp.float32, minval=-bound, maxval=bound)
    return params


def actor_forward_ref(obs, legal_actions, params, *, mean=False):
    """Pure-JAX reference matching the PyTorch forward."""
    x = jax.nn.relu(obs @ params["w1"] + params["b1"])
    x = jax.nn.relu(x @ params["w2"] + params["b2"])
    x = x @ params["w3"] + params["b3"]
    return x if mean else x + legal_actions


if __name__ == "__main__":
    # Small shapes consistent with the module: Actor(state_shape, action_num, mlp_layers)
    mlp_layers = [64, 128, 128]     # layer_dims[0..2]
    action_num = 32
    batch = 8

    key = jax.random.PRNGKey(0)
    key, k_obs, k_legal, k_params = jax.random.split(key, 4)

    obs = jax.random.normal(k_obs, (batch, mlp_layers[0]), jnp.float32)
    # legal_actions mask: 0 for legal, large negative for illegal (typical usage)
    legal_mask = jax.random.bernoulli(k_legal, 0.7, (batch, action_num))
    legal_actions = jnp.where(legal_mask, 0.0, -1e9).astype(jnp.float32)

    params = init_actor_params(k_params, mlp_layers, action_num)

    # f32 path, mean=False (logits + legal_actions)
    out = jax.block_until_ready(actor_forward(obs, legal_actions, params, mean=False))
    ref = actor_forward_ref(obs, legal_actions, params, mean=False)
    assert out.shape == (batch, action_num)
    assert jnp.allclose(out, ref, atol=1e-4, rtol=1e-4), "mismatch (mean=False, f32)"

    # f32 path, mean=True (raw logits; legal_actions is not even passed to the kernel)
    out_mean = jax.block_until_ready(actor_forward(obs, legal_actions, params, mean=True))
    ref_mean = actor_forward_ref(obs, legal_actions, params, mean=True)
    assert out_mean.shape == (batch, action_num)
    assert jnp.allclose(out_mean, ref_mean, atol=1e-4, rtol=1e-4), "mismatch (mean=True, f32)"

    # bf16 fast path (v6e/v7x MXU): bf16 weights/activations, f32 accumulation,
    # f32 bias/ReLU/legal add. Compared loosely against the f32 reference.
    out_bf16 = jax.block_until_ready(
        actor_forward(obs, legal_actions, params, mean=False,
                      compute_dtype=jnp.bfloat16))
    assert jnp.allclose(out_bf16, ref, atol=1e-1, rtol=1e-1), "mismatch (mean=False, bf16)"

    print("KERNEL_OK")
</pallas_src>

<mosaic_0001>
module attributes {stable_mosaic.version = 11 : i64} {
  func.func @_actor_kernel_masked(%arg0: i32, %arg1: memref<8x128xf32, #tpu.memory_space<vmem>>, %arg2: memref<8x128xf32, #tpu.memory_space<vmem>>, %arg3: memref<128x128xf32, #tpu.memory_space<vmem>>, %arg4: memref<1x128xf32, #tpu.memory_space<vmem>>, %arg5: memref<128x128xf32, #tpu.memory_space<vmem>>, %arg6: memref<1x128xf32, #tpu.memory_space<vmem>>, %arg7: memref<128x128xf32, #tpu.memory_space<vmem>>, %arg8: memref<1x128xf32, #tpu.memory_space<vmem>>, %arg9: memref<8x128xf32, #tpu.memory_space<vmem>>) attributes {dimension_semantics = [#tpu.dimension_semantics<parallel>], iteration_bounds = array<i64: 1>, scalar_prefetch = 0 : i64, scratch_operands = 0 : i64, tpu.core_type = #tpu.core_type<tc>, window_params = [{transform_indices = @transform_0, window_bounds = array<i64: 8, 128>}, {transform_indices = @transform_1, window_bounds = array<i64: 8, 128>}, {pipeline_mode = #tpu.pipeline_mode<synchronous>, transform_indices = @transform_2, window_bounds = array<i64: 128, 128>}, {pipeline_mode = #tpu.pipeline_mode<synchronous>, transform_indices = @transform_3, window_bounds = array<i64: 1, 128>}, {pipeline_mode = #tpu.pipeline_mode<synchronous>, transform_indices = @transform_4, window_bounds = array<i64: 128, 128>}, {pipeline_mode = #tpu.pipeline_mode<synchronous>, transform_indices = @transform_5, window_bounds = array<i64: 1, 128>}, {pipeline_mode = #tpu.pipeline_mode<synchronous>, transform_indices = @transform_6, window_bounds = array<i64: 128, 128>}, {pipeline_mode = #tpu.pipeline_mode<synchronous>, transform_indices = @transform_7, window_bounds = array<i64: 1, 128>}, {transform_indices = @transform_8, window_bounds = array<i64: 8, 128>}]} {
    %c0 = arith.constant 0 : index
    %c0_0 = arith.constant 0 : index
    %0 = vector.load %arg1[%c0, %c0_0] : memref<8x128xf32, #tpu.memory_space<vmem>>, vector<8x128xf32>
    %c0_1 = arith.constant 0 : index
    %c0_2 = arith.constant 0 : index
    %1 = vector.load %arg3[%c0_1, %c0_2] : memref<128x128xf32, #tpu.memory_space<vmem>>, vector<128x128xf32>
    %cst = arith.constant dense<0.000000e+00> : vector<8x128xf32>
    %2 = tpu.matmul %0, %1, %cst {dimension_numbers = #tpu.dot_dimension_numbers<[1], [0], [0], [1], [0, 0, 1, 1], [], []>} : vector<8x128xf32>, vector<128x128xf32>, vector<8x128xf32> -> vector<8x128xf32>
    %c0_3 = arith.constant 0 : index
    %c0_4 = arith.constant 0 : index
    %3 = vector.load %arg4[%c0_3, %c0_4] : memref<1x128xf32, #tpu.memory_space<vmem>>, vector<1x128xf32>
    %4 = vector.broadcast %3 : vector<1x128xf32> to vector<8x128xf32>
    %5 = arith.addf %2, %4 : vector<8x128xf32>
    %cst_5 = arith.constant 0.000000e+00 : f32
    %6 = vector.broadcast %cst_5 : f32 to vector<8x128xf32>
    %7 = arith.maximumf %5, %6 : vector<8x128xf32>
    %c0_6 = arith.constant 0 : index
    %c0_7 = arith.constant 0 : index
    %8 = vector.load %arg5[%c0_6, %c0_7] : memref<128x128xf32, #tpu.memory_space<vmem>>, vector<128x128xf32>
    %cst_8 = arith.constant dense<0.000000e+00> : vector<8x128xf32>
    %9 = tpu.matmul %7, %8, %cst_8 {dimension_numbers = #tpu.dot_dimension_numbers<[1], [0], [0], [1], [0, 0, 1, 1], [], []>} : vector<8x128xf32>, vector<128x128xf32>, vector<8x128xf32> -> vector<8x128xf32>
    %c0_9 = arith.constant 0 : index
    %c0_10 = arith.constant 0 : index
    %10 = vector.load %arg6[%c0_9, %c0_10] : memref<1x128xf32, #tpu.memory_space<vmem>>, vector<1x128xf32>
    %11 = vector.broadcast %10 : vector<1x128xf32> to vector<8x128xf32>
    %12 = arith.addf %9, %11 : vector<8x128xf32>
    %cst_11 = arith.constant 0.000000e+00 : f32
    %13 = vector.broadcast %cst_11 : f32 to vector<8x128xf32>
    %14 = arith.maximumf %12, %13 : vector<8x128xf32>
    %c0_12 = arith.constant 0 : index
    %c0_13 = arith.constant 0 : index
    %15 = vector.load %arg7[%c0_12, %c0_13] : memref<128x128xf32, #tpu.memory_space<vmem>>, vector<128x128xf32>
    %cst_14 = arith.constant dense<0.000000e+00> : vector<8x128xf32>
    %16 = tpu.matmul %14, %15, %cst_14 {dimension_numbers = #tpu.dot_dimension_numbers<[1], [0], [0], [1], [0, 0, 1, 1], [], []>} : vector<8x128xf32>, vector<128x128xf32>, vector<8x128xf32> -> vector<8x128xf32>
    %c0_15 = arith.constant 0 : index
    %c0_16 = arith.constant 0 : index
    %17 = vector.load %arg8[%c0_15, %c0_16] : memref<1x128xf32, #tpu.memory_space<vmem>>, vector<1x128xf32>
    %18 = vector.broadcast %17 : vector<1x128xf32> to vector<8x128xf32>
    %19 = arith.addf %16, %18 : vector<8x128xf32>
    %c0_17 = arith.constant 0 : index
    %c0_18 = arith.constant 0 : index
    %20 = vector.load %arg2[%c0_17, %c0_18] : memref<8x128xf32, #tpu.memory_space<vmem>>, vector<8x128xf32>
    %21 = arith.addf %19, %20 : vector<8x128xf32>
    %c0_19 = arith.constant 0 : index
    %c0_20 = arith.constant 0 : index
    %22 = vector.load %arg9[%c0_19, %c0_20] : memref<8x128xf32, #tpu.memory_space<vmem>>, vector<8x128xf32>
    tpu.vector_store %arg9[%c0_19, %c0_20], %21 {strides = array<i32>} : memref<8x128xf32, #tpu.memory_space<vmem>>, vector<8x128xf32>,
    return
  }
  func.func @transform_0(%arg0: i32) -> (i32, i32) {
    %c0_i32 = arith.constant 0 : i32
    %c0_i32_0 = arith.constant 0 : i32
    return %arg0, %c0_i32 : i32, i32
  }
  func.func @transform_1(%arg0: i32) -> (i32, i32) {
    %c0_i32 = arith.constant 0 : i32
    %c0_i32_0 = arith.constant 0 : i32
    return %arg0, %c0_i32 : i32, i32
  }
  func.func @transform_2(%arg0: i32) -> (i32, i32) {
    %c0_i32 = arith.constant 0 : i32
    %c0_i32_0 = arith.constant 0 : i32
    %c0_i32_1 = arith.constant 0 : i32
    return %c0_i32, %c0_i32_0 : i32, i32
  }
  func.func @transform_3(%arg0: i32) -> (i32, i32) {
    %c0_i32 = arith.constant 0 : i32
    %c0_i32_0 = arith.constant 0 : i32
    %c0_i32_1 = arith.constant 0 : i32
    return %c0_i32, %c0_i32_0 : i32, i32
  }
  func.func @transform_4(%arg0: i32) -> (i32, i32) {
    %c0_i32 = arith.constant 0 : i32
    %c0_i32_0 = arith.constant 0 : i32
    %c0_i32_1 = arith.constant 0 : i32
    return %c0_i32, %c0_i32_0 : i32, i32
  }
  func.func @transform_5(%arg0: i32) -> (i32, i32) {
    %c0_i32 = arith.constant 0 : i32
    %c0_i32_0 = arith.constant 0 : i32
    %c0_i32_1 = arith.constant 0 : i32
    return %c0_i32, %c0_i32_0 : i32, i32
  }
  func.func @transform_6(%arg0: i32) -> (i32, i32) {
    %c0_i32 = arith.constant 0 : i32
    %c0_i32_0 = arith.constant 0 : i32
    %c0_i32_1 = arith.constant 0 : i32
    return %c0_i32, %c0_i32_0 : i32, i32
  }
  func.func @transform_7(%arg0: i32) -> (i32, i32) {
    %c0_i32 = arith.constant 0 : i32
    %c0_i32_0 = arith.constant 0 : i32
    %c0_i32_1 = arith.constant 0 : i32
    return %c0_i32, %c0_i32_0 : i32, i32
  }
  func.func @transform_8(%arg0: i32) -> (i32, i32) {
    %c0_i32 = arith.constant 0 : i32
    %c0_i32_0 = arith.constant 0 : i32
    return %arg0, %c0_i32 : i32, i32
  }
}

</mosaic_0001>

<llo_original>
// kernel: tpu_custom_call.1
$region0: #{tpu_custom_call.1}
  #allocation0 [shape = 'u32[]', space=smem, size = 0x4, offset = 0x4, fixed_abs, tag = 'smem constant byte address 0x4 - core index']
  #allocation1 [shape = 'u32[144,128]{1,0:T(1,128)}', space=vmem, size = 0x12000, scoped, tag = 'internal scratch']
  %s0 = inlined_call_operand.hbm [shape: f32[8,128], index: 0, kind: input, shape index: {}]
  %s1 = inlined_call_operand.hbm [shape: f32[8,128], index: 1, kind: input, shape index: {}]
  %s2 = inlined_call_operand.hbm [shape: f32[128,128], index: 2, kind: input, shape index: {}]
  %s3 = inlined_call_operand.vmem [shape: f32[1,128], index: 3, kind: input, shape index: {}]
  %s4 = inlined_call_operand.hbm [shape: f32[128,128], index: 4, kind: input, shape index: {}]
  %s5 = inlined_call_operand.vmem [shape: f32[1,128], index: 5, kind: input, shape index: {}]
  %s6 = inlined_call_operand.hbm [shape: f32[128,128], index: 6, kind: input, shape index: {}]
  %s7 = inlined_call_operand.vmem [shape: f32[1,128], index: 7, kind: input, shape index: {}]
  %s8 = inlined_call_operand.hbm [shape: f32[8,128], index: 8, kind: output, shape index: {}]
  %s9 = sld [smem:[#allocation0]]
  $region62: #{tpu_custom_call.1} parent=0
    _
  %s11 = ssub.s32 1, %s9
  %s12 = scalar_select 0, %s11, %s9
  $region1: #{tpu_custom_call.1} parent=0
    #allocation2 [shape = 'u8[4096]{0}', space=vmem, size = 0x1000, scoped, tag = 'input window, operand 0, single buffered']
    #allocation3 [shape = 's32[1]{0}', space=sflag, size = 0x4, scoped, tag = 'scoped memory for tpu_custom_call.1']
    #allocation4 [shape = 's32[1]{0}', space=sflag, size = 0x4, scoped, tag = 'scoped memory for tpu_custom_call.1']
    #allocation5 [shape = 'u8[4096]{0}', space=vmem, size = 0x1000, scoped, tag = 'input window, operand 1, single buffered']
    #allocation6 [shape = 's32[1]{0}', space=sflag, size = 0x4, scoped, tag = 'scoped memory for tpu_custom_call.1']
    #allocation7 [shape = 'u8[65536]{0}', space=vmem, size = 0x10000, scoped, tag = 'input window, operand 2, single buffered']
    #allocation8 [shape = 'u8[65536]{0}', space=vmem, size = 0x10000, scoped, tag = 'input window, operand 4, single buffered']
    #allocation9 [shape = 's32[1]{0}', space=sflag, size = 0x4, scoped, tag = 'scoped memory for tpu_custom_call.1']
    #allocation10 [shape = 'u8[65536]{0}', space=vmem, size = 0x10000, scoped, tag = 'input window, operand 6, single buffered']
    #allocation11 [shape = 'u8[4096]{0}', space=vmem, size = 0x1000, scoped, tag = 'output window, operand 0, single buffered']
    %13 = vsyncpa [#allocation3], 0
    %14 = vsyncpa [#allocation6], 0
    %15 = vsyncpa [#allocation9], 0
    %16 = vsyncpa [#allocation4], 0
    // Predicated region
    $region2: #{tpu_custom_call.1} parent=1 // pred_check
      _
    $region3: #{tpu_custom_call.1} parent=1 // pred_check_branch
      %18 = sbr.rel (0) target = $region5
    $region4: #{tpu_custom_call.1} parent=1 // pred_region
      %s20 = ssub.s32 128, 128
      %21 = vsyncadd [#allocation3], %s20
      %s23 = sshll.u32 [#allocation2], 4
      %s24 = int_to_ptr.vmem [resolvable:$true] %s23
      %26 = dma.hbm_to_vmem [thread:$0]  %s0, 128, %s24, [#allocation3]
    $region5: #{tpu_custom_call.1} parent=1 // pred_fallthru
      _
    // Predicated region
    $region6: #{tpu_custom_call.1} parent=1 // pred_check
      _
    $region7: #{tpu_custom_call.1} parent=1 // pred_check_branch
      %28 = sbr.rel (0) target = $region9
    $region8: #{tpu_custom_call.1} parent=1 // pred_region
      %s30 = ssub.s32 128, 128
      %31 = vsyncadd [#allocation6], %s30
      %s33 = sshll.u32 [#allocation5], 4
      %s34 = int_to_ptr.vmem [resolvable:$true] %s33
      %36 = dma.hbm_to_vmem [thread:$0]  %s1, 128, %s34, [#allocation6]
    $region9: #{tpu_custom_call.1} parent=1 // pred_fallthru
      _
    // Predicated region
    $region10: #{tpu_custom_call.1} parent=1 // pred_check
      _
    $region11: #{tpu_custom_call.1} parent=1 // pred_check_branch
      %38 = sbr.rel (0) target = $region13
    $region12: #{tpu_custom_call.1} parent=1 // pred_region
      %s40 = ssub.s32 2048, 2048
      %41 = vsyncadd [#allocation6], %s40
      %s42 = sshll.u32 [#allocation7], 4
      %s43 = int_to_ptr.vmem [resolvable:$true] %s42
      %48 = dma.hbm_to_vmem [thread:$0]  %s2, 2048, %s43, [#allocation6], 128, 128, 8
    $region13: #{tpu_custom_call.1} parent=1 // pred_fallthru
      _
    // Predicated region
    $region14: #{tpu_custom_call.1} parent=1 // pred_check
      _
    $region15: #{tpu_custom_call.1} parent=1 // pred_check_branch
      %50 = sbr.rel (0) target = $region17
    $region16: #{tpu_custom_call.1} parent=1 // pred_region
      _
    $region17: #{tpu_custom_call.1} parent=1 // pred_fallthru
      _
    // Predicated region
    $region18: #{tpu_custom_call.1} parent=1 // pred_check
      _
    $region19: #{tpu_custom_call.1} parent=1 // pred_check_branch
      %52 = sbr.rel (0) target = $region21
    $region20: #{tpu_custom_call.1} parent=1 // pred_region
      %s54 = ssub.s32 2048, 2048
      %55 = vsyncadd [#allocation9], %s54
      %s56 = sshll.u32 [#allocation8], 4
      %s57 = int_to_ptr.vmem [resolvable:$true] %s56
      %62 = dma.hbm_to_vmem [thread:$0]  %s4, 2048, %s57, [#allocation9], 128, 128, 8
    $region21: #{tpu_custom_call.1} parent=1 // pred_fallthru
      _
    // Predicated region
    $region22: #{tpu_custom_call.1} parent=1 // pred_check
      _
    $region23: #{tpu_custom_call.1} parent=1 // pred_check_branch
      %64 = sbr.rel (0) target = $region25
    $region24: #{tpu_custom_call.1} parent=1 // pred_region
      _
    $region25: #{tpu_custom_call.1} parent=1 // pred_fallthru
      _
    // Predicated region
    $region26: #{tpu_custom_call.1} parent=1 // pred_check
      _
    $region27: #{tpu_custom_call.1} parent=1 // pred_check_branch
      %66 = sbr.rel (0) target = $region29
    $region28: #{tpu_custom_call.1} parent=1 // pred_region
      %s68 = ssub.s32 2048, 2048
      %69 = vsyncadd [#allocation9], %s68
      %s70 = sshll.u32 [#allocation10], 4
      %s71 = int_to_ptr.vmem [resolvable:$true] %s70
      %76 = dma.hbm_to_vmem [thread:$0]  %s6, 2048, %s71, [#allocation9], 128, 128, 8
    $region29: #{tpu_custom_call.1} parent=1 // pred_fallthru
      _
    // Predicated region
    $region30: #{tpu_custom_call.1} parent=1 // pred_check
      _
    $region31: #{tpu_custom_call.1} parent=1 // pred_check_branch
      %78 = sbr.rel (0) target = $region33
    $region32: #{tpu_custom_call.1} parent=1 // pred_region
      _
    $region33: #{tpu_custom_call.1} parent=1 // pred_fallthru
      _
    // Predicated region
    $region34: #{tpu_custom_call.1} parent=1 // pred_check
      _
    $region35: #{tpu_custom_call.1} parent=1 // pred_check_branch
      %80 = sbr.rel (0) target = $region37
    $region36: #{tpu_custom_call.1} parent=1 // pred_region
      %81 = dma.done [#allocation3], 128
    $region37: #{tpu_custom_call.1} parent=1 // pred_fallthru
      _
    // Predicated region
    $region38: #{tpu_custom_call.1} parent=1 // pred_check
      _
    $region39: #{tpu_custom_call.1} parent=1 // pred_check_branch
      %83 = sbr.rel (0) target = $region41
    $region40: #{tpu_custom_call.1} parent=1 // pred_region
      %84 = dma.done [#allocation6], 128
    $region41: #{tpu_custom_call.1} parent=1 // pred_fallthru
      _
    // Predicated region
    $region42: #{tpu_custom_call.1} parent=1 // pred_check
      _
    $region43: #{tpu_custom_call.1} parent=1 // pred_check_branch
      %86 = sbr.rel (0) target = $region45
    $region44: #{tpu_custom_call.1} parent=1 // pred_region
      %87 = dma.done [#allocation6], 2048
    $region45: #{tpu_custom_call.1} parent=1 // pred_fallthru
      _
    // Predicated region
    $region46: #{tpu_custom_call.1} parent=1 // pred_check
      _
    $region47: #{tpu_custom_call.1} parent=1 // pred_check_branch
      %89 = sbr.rel (0) target = $region49
    $region48: #{tpu_custom_call.1} parent=1 // pred_region
      %90 = dma.done [#allocation9], 2048
    $region49: #{tpu_custom_call.1} parent=1 // pred_fallthru
      _
    // Predicated region
    $region50: #{tpu_custom_call.1} parent=1 // pred_check
      _
    $region51: #{tpu_custom_call.1} parent=1 // pred_check_branch
      %92 = sbr.rel (0) target = $region53
    $region52: #{tpu_custom_call.1} parent=1 // pred_region
      %93 = dma.done [#allocation9], 2048
    $region53: #{tpu_custom_call.1} parent=1 // pred_fallthru
      _
    %v94 = vld [vmem:[#allocation2] sm:$0xff]
    %v95 = vld [vmem:[#allocation7] sm:$0xff]
    %v96 = vld [vmem:[#allocation7 + $0x8] sm:$0xff]
    %v97 = vld [vmem:[#allocation7 + $0x10] sm:$0xff]
    %v98 = vld [vmem:[#allocation7 + $0x18] sm:$0xff]
    %v99 = vld [vmem:[#allocation7 + $0x20] sm:$0xff]
    %v100 = vld [vmem:[#allocation7 + $0x28] sm:$0xff]
    %v101 = vld [vmem:[#allocation7 + $0x30] sm:$0xff]
    %v102 = vld [vmem:[#allocation7 + $0x38] sm:$0xff]
    %v103 = vld [vmem:[#allocation7 + $0x40] sm:$0xff]
    %v104 = vld [vmem:[#allocation7 + $0x48] sm:$0xff]
    %v105 = vld [vmem:[#allocation7 + $0x50] sm:$0xff]
    %v106 = vld [vmem:[#allocation7 + $0x58] sm:$0xff]
    %v107 = vld [vmem:[#allocation7 + $0x60] sm:$0xff]
    %v108 = vld [vmem:[#allocation7 + $0x68] sm:$0xff]
    %v109 = vld [vmem:[#allocation7 + $0x70] sm:$0xff]
    %v110 = vld [vmem:[#allocation7 + $0x78] sm:$0xff]
    %v111 = vld [vmem:[%s3] sm:$0x1]
    %v113 = vlaneseq
    %v114 = vshrl.u32 %v113, 7
    %v115 = vsub.s32 0, %v114
    %v116 = vrot.slane %v111, %v115
    %118 = vmatprep.subr.mxu0 0.0
    %119 = vmatpush1.msra.mxu0 %v110
    %120 = vmatprep.subr.mxu0 0.0
    %121 = vmatpush1.msra.mxu0 %v109
    %122 = vmatprep.subr.mxu0 0.0
    %123 = vmatpush1.msra.mxu0 %v108
    %124 = vmatprep.subr.mxu0 0.0
    %125 = vmatpush1.msra.mxu0 %v107
    %126 = vmatprep.subr.mxu0 0.0
    %127 = vmatpush1.msra.mxu0 %v106
    %128 = vmatprep.subr.mxu0 0.0
    %129 = vmatpush1.msra.mxu0 %v105
    %130 = vmatprep.subr.mxu0 0.0
    %131 = vmatpush1.msra.mxu0 %v104
    %132 = vmatprep.subr.mxu0 0.0
    %133 = vmatpush1.msra.mxu0 %v103
    %134 = vmatprep.subr.mxu0 0.0
    %135 = vmatpush1.msra.mxu0 %v102
    %136 = vmatprep.subr.mxu0 0.0
    %137 = vmatpush1.msra.mxu0 %v101
    %138 = vmatprep.subr.mxu0 0.0
    %139 = vmatpush1.msra.mxu0 %v100
    %140 = vmatprep.subr.mxu0 0.0
    %141 = vmatpush1.msra.mxu0 %v99
    %142 = vmatprep.subr.mxu0 0.0
    %143 = vmatpush1.msra.mxu0 %v98
    %144 = vmatprep.subr.mxu0 0.0
    %145 = vmatpush1.msra.mxu0 %v97
    %146 = vmatprep.subr.mxu0 0.0
    %147 = vmatpush1.msra.mxu0 %v96
    %148 = vmatprep.subr.mxu0 0.0
    %149 = vmatpush1.msra.mxu0 %v95
    %150 = vmatprep.subr.mxu0 0.0
    %151 = vmatpush2.msra.mxu0 0.0
    %152 = vmatprep.subr.mxu0 0.0
    %153 = vmatpush2.msra.mxu0 0.0
    %154 = vmatprep.subr.mxu0 0.0
    %155 = vmatpush2.msra.mxu0 0.0
    %156 = vmatprep.subr.mxu0 0.0
    %157 = vmatpush2.msra.mxu0 0.0
    %158 = vmatprep.subr.mxu0 0.0
    %159 = vmatpush2.msra.mxu0 0.0
    %160 = vmatprep.subr.mxu0 0.0
    %161 = vmatpush2.msra.mxu0 0.0
    %162 = vmatprep.subr.mxu0 0.0
    %163 = vmatpush2.msra.mxu0 0.0
    %164 = vmatprep.subr.mxu0 0.0
    %165 = vmatpush2.msra.mxu0 0.0
    %166 = vmatprep.subr.mxu0 0.0
    %167 = vmatpush2.msra.mxu0 0.0
    %168 = vmatprep.subr.mxu0 0.0
    %169 = vmatpush2.msra.mxu0 0.0
    %170 = vmatprep.subr.mxu0 0.0
    %171 = vmatpush2.msra.mxu0 0.0
    %172 = vmatprep.subr.mxu0 0.0
    %173 = vmatpush2.msra.mxu0 0.0
    %174 = vmatprep.subr.mxu0 0.0
    %175 = vmatpush2.msra.mxu0 0.0
    %176 = vmatprep.subr.mxu0 0.0
    %177 = vmatpush2.msra.mxu0 0.0
    %178 = vmatprep.subr.mxu0 0.0
    %179 = vmatpush2.msra.mxu0 0.0
    %180 = vmatprep.subr.mxu0 0.0
    %181 = vmatpush2.msra.mxu0 0.0
    %182 = vmatprep.mubr.f32.mxu0 0.0
    %183 = vmatmul.mubr.f32.gmra.mxu0 %v94
    %v184 = vpop.f32.mrf.mxu0
    %v185 = vadd.f32 %v116, %v184
    %v186 = vpop.f32.mrf.mxu0
    %187 = vdwg.mxu0
    %v188 = vmax.f32 %v185, 0.0
    %v189 = vld [vmem:[#allocation8] sm:$0xff]
    %v190 = vld [vmem:[#allocation8 + $0x8] sm:$0xff]
    %v191 = vld [vmem:[#allocation8 + $0x10] sm:$0xff]
    %v192 = vld [vmem:[#allocation8 + $0x18] sm:$0xff]
    %v193 = vld [vmem:[#allocation8 + $0x20] sm:$0xff]
    %v194 = vld [vmem:[#allocation8 + $0x28] sm:$0xff]
    %v195 = vld [vmem:[#allocation8 + $0x30] sm:$0xff]
    %v196 = vld [vmem:[#allocation8 + $0x38] sm:$0xff]
    %v197 = vld [vmem:[#allocation8 + $0x40] sm:$0xff]
    %v198 = vld [vmem:[#allocation8 + $0x48] sm:$0xff]
    %v199 = vld [vmem:[#allocation8 + $0x50] sm:$0xff]
    %v200 = vld [vmem:[#allocation8 + $0x58] sm:$0xff]
    %v201 = vld [vmem:[#allocation8 + $0x60] sm:$0xff]
    %v202 = vld [vmem:[#allocation8 + $0x68] sm:$0xff]
    %v203 = vld [vmem:[#allocation8 + $0x70] sm:$0xff]
    %v204 = vld [vmem:[#allocation8 + $0x78] sm:$0xff]
    %v205 = vld [vmem:[%s5] sm:$0x1]
    %v207 = vlaneseq
    %v208 = vshrl.u32 %v207, 7
    %v209 = vsub.s32 0, %v208
    %v210 = vrot.slane %v205, %v209
    %212 = vmatprep.subr.mxu0 0.0
    %213 = vmatpush1.msra.mxu0 %v204
    %214 = vmatprep.subr.mxu0 0.0
    %215 = vmatpush1.msra.mxu0 %v203
    %216 = vmatprep.subr.mxu0 0.0
    %217 = vmatpush1.msra.mxu0 %v202
    %218 = vmatprep.subr.mxu0 0.0
    %219 = vmatpush1.msra.mxu0 %v201
    %220 = vmatprep.subr.mxu0 0.0
    %221 = vmatpush1.msra.mxu0 %v200
    %222 = vmatprep.subr.mxu0 0.0
    %223 = vmatpush1.msra.mxu0 %v199
    %224 = vmatprep.subr.mxu0 0.0
    %225 = vmatpush1.msra.mxu0 %v198
    %226 = vmatprep.subr.mxu0 0.0
    %227 = vmatpush1.msra.mxu0 %v197
    %228 = vmatprep.subr.mxu0 0.0
    %229 = vmatpush1.msra.mxu0 %v196
    %230 = vmatprep.subr.mxu0 0.0
    %231 = vmatpush1.msra.mxu0 %v195
    %232 = vmatprep.subr.mxu0 0.0
    %233 = vmatpush1.msra.mxu0 %v194
    %234 = vmatprep.subr.mxu0 0.0
    %235 = vmatpush1.msra.mxu0 %v193
    %236 = vmatprep.subr.mxu0 0.0
    %237 = vmatpush1.msra.mxu0 %v192
    %238 = vmatprep.subr.mxu0 0.0
    %239 = vmatpush1.msra.mxu0 %v191
    %240 = vmatprep.subr.mxu0 0.0
    %241 = vmatpush1.msra.mxu0 %v190
    %242 = vmatprep.subr.mxu0 0.0
    %243 = vmatpush1.msra.mxu0 %v189
    %244 = vmatprep.subr.mxu0 0.0
    %245 = vmatpush2.msra.mxu0 0.0
    %246 = vmatprep.subr.mxu0 0.0
    %247 = vmatpush2.msra.mxu0 0.0
    %248 = vmatprep.subr.mxu0 0.0
    %249 = vmatpush2.msra.mxu0 0.0
    %250 = vmatprep.subr.mxu0 0.0
    %251 = vmatpush2.msra.mxu0 0.0
    %252 = vmatprep.subr.mxu0 0.0
    %253 = vmatpush2.msra.mxu0 0.0
    %254 = vmatprep.subr.mxu0 0.0
    %255 = vmatpush2.msra.mxu0 0.0
    %256 = vmatprep.subr.mxu0 0.0
    %257 = vmatpush2.msra.mxu0 0.0
    %258 = vmatprep.subr.mxu0 0.0
    %259 = vmatpush2.msra.mxu0 0.0
    %260 = vmatprep.subr.mxu0 0.0
    %261 = vmatpush2.msra.mxu0 0.0
    %262 = vmatprep.subr.mxu0 0.0
    %263 = vmatpush2.msra.mxu0 0.0
    %264 = vmatprep.subr.mxu0 0.0
    %265 = vmatpush2.msra.mxu0 0.0
    %266 = vmatprep.subr.mxu0 0.0
    %267 = vmatpush2.msra.mxu0 0.0
    %268 = vmatprep.subr.mxu0 0.0
    %269 = vmatpush2.msra.mxu0 0.0
    %270 = vmatprep.subr.mxu0 0.0
    %271 = vmatpush2.msra.mxu0 0.0
    %272 = vmatprep.subr.mxu0 0.0
    %273 = vmatpush2.msra.mxu0 0.0
    %274 = vmatprep.subr.mxu0 0.0
    %275 = vmatpush2.msra.mxu0 0.0
    %276 = vmatprep.mubr.f32.mxu0 0.0
    %277 = vmatmul.mubr.f32.gmra.mxu0 %v188
    %v278 = vpop.f32.mrf.mxu0
    %v279 = vadd.f32 %v210, %v278
    %v280 = vpop.f32.mrf.mxu0
    %281 = vdwg.mxu0
    %v282 = vmax.f32 %v279, 0.0
    %v283 = vld [vmem:[#allocation10] sm:$0xff]
    %v284 = vld [vmem:[#allocation10 + $0x8] sm:$0xff]
    %v285 = vld [vmem:[#allocation10 + $0x10] sm:$0xff]
    %v286 = vld [vmem:[#allocation10 + $0x18] sm:$0xff]
    %v287 = vld [vmem:[#allocation10 + $0x20] sm:$0xff]
    %v288 = vld [vmem:[#allocation10 + $0x28] sm:$0xff]
    %v289 = vld [vmem:[#allocation10 + $0x30] sm:$0xff]
    %v290 = vld [vmem:[#allocation10 + $0x38] sm:$0xff]
    %v291 = vld [vmem:[#allocation10 + $0x40] sm:$0xff]
    %v292 = vld [vmem:[#allocation10 + $0x48] sm:$0xff]
    %v293 = vld [vmem:[#allocation10 + $0x50] sm:$0xff]
    %v294 = vld [vmem:[#allocation10 + $0x58] sm:$0xff]
    %v295 = vld [vmem:[#allocation10 + $0x60] sm:$0xff]
    %v296 = vld [vmem:[#allocation10 + $0x68] sm:$0xff]
    %v297 = vld [vmem:[#allocation10 + $0x70] sm:$0xff]
    %v298 = vld [vmem:[#allocation10 + $0x78] sm:$0xff]
    %v299 = vld [vmem:[%s7] sm:$0x1]
    %v301 = vlaneseq
    %v302 = vshrl.u32 %v301, 7
    %v303 = vsub.s32 0, %v302
    %v304 = vrot.slane %v299, %v303
    %306 = vmatprep.subr.mxu0 0.0
    %307 = vmatpush1.msra.mxu0 %v298
    %308 = vmatprep.subr.mxu0 0.0
    %309 = vmatpush1.msra.mxu0 %v297
    %310 = vmatprep.subr.mxu0 0.0
    %311 = vmatpush1.msra.mxu0 %v296
    %312 = vmatprep.subr.mxu0 0.0
    %313 = vmatpush1.msra.mxu0 %v295
    %314 = vmatprep.subr.mxu0 0.0
    %315 = vmatpush1.msra.mxu0 %v294
    %316 = vmatprep.subr.mxu0 0.0
    %317 = vmatpush1.msra.mxu0 %v293
    %318 = vmatprep.subr.mxu0 0.0
    %319 = vmatpush1.msra.mxu0 %v292
    %320 = vmatprep.subr.mxu0 0.0
    %321 = vmatpush1.msra.mxu0 %v291
    %322 = vmatprep.subr.mxu0 0.0
    %323 = vmatpush1.msra.mxu0 %v290
    %324 = vmatprep.subr.mxu0 0.0
    %325 = vmatpush1.msra.mxu0 %v289
    %326 = vmatprep.subr.mxu0 0.0
    %327 = vmatpush1.msra.mxu0 %v288
    %328 = vmatprep.subr.mxu0 0.0
    %329 = vmatpush1.msra.mxu0 %v287
    %330 = vmatprep.subr.mxu0 0.0
    %331 = vmatpush1.msra.mxu0 %v286
    %332 = vmatprep.subr.mxu0 0.0
    %333 = vmatpush1.msra.mxu0 %v285
    %334 = vmatprep.subr.mxu0 0.0
    %335 = vmatpush1.msra.mxu0 %v284
    %336 = vmatprep.subr.mxu0 0.0
    %337 = vmatpush1.msra.mxu0 %v283
    %338 = vmatprep.subr.mxu0 0.0
    %339 = vmatpush2.msra.mxu0 0.0
    %340 = vmatprep.subr.mxu0 0.0
    %341 = vmatpush2.msra.mxu0 0.0
    %342 = vmatprep.subr.mxu0 0.0
    %343 = vmatpush2.msra.mxu0 0.0
    %344 = vmatprep.subr.mxu0 0.0
    %345 = vmatpush2.msra.mxu0 0.0
    %346 = vmatprep.subr.mxu0 0.0
    %347 = vmatpush2.msra.mxu0 0.0
    %348 = vmatprep.subr.mxu0 0.0
    %349 = vmatpush2.msra.mxu0 0.0
    %350 = vmatprep.subr.mxu0 0.0
    %351 = vmatpush2.msra.mxu0 0.0
    %352 = vmatprep.subr.mxu0 0.0
    %353 = vmatpush2.msra.mxu0 0.0
    %354 = vmatprep.subr.mxu0 0.0
    %355 = vmatpush2.msra.mxu0 0.0
    %356 = vmatprep.subr.mxu0 0.0
    %357 = vmatpush2.msra.mxu0 0.0
    %358 = vmatprep.subr.mxu0 0.0
    %359 = vmatpush2.msra.mxu0 0.0
    %360 = vmatprep.subr.mxu0 0.0
    %361 = vmatpush2.msra.mxu0 0.0
    %362 = vmatprep.subr.mxu0 0.0
    %363 = vmatpush2.msra.mxu0 0.0
    %364 = vmatprep.subr.mxu0 0.0
    %365 = vmatpush2.msra.mxu0 0.0
    %366 = vmatprep.subr.mxu0 0.0
    %367 = vmatpush2.msra.mxu0 0.0
    %368 = vmatprep.subr.mxu0 0.0
    %369 = vmatpush2.msra.mxu0 0.0
    %370 = vmatprep.mubr.f32.mxu0 0.0
    %371 = vmatmul.mubr.f32.gmra.mxu0 %v282
    %v372 = vpop.f32.mrf.mxu0
    %v373 = vadd.f32 %v304, %v372
    %v374 = vpop.f32.mrf.mxu0
    %375 = vdwg.mxu0
    %v376 = vld [vmem:[#allocation5] sm:$0xff]
    %v377 = vadd.f32 %v373, %v376
    %378 = vst [vmem:[#allocation11] sm:$0xff] %v377
    // Predicated region
    $region54: #{tpu_custom_call.1} parent=1 // pred_check
      _
    $region55: #{tpu_custom_call.1} parent=1 // pred_check_branch
      %380 = sbr.rel (0) target = $region57
    $region56: #{tpu_custom_call.1} parent=1 // pred_region
      %s382 = ssub.s32 128, 128
      %383 = vsyncadd [#allocation4], %s382
      %s385 = sshll.u32 [#allocation11], 4
      %s386 = int_to_ptr.vmem [resolvable:$true] %s385
      %388 = dma.vmem_to_hbm [thread:$0]  %s386, 128, %s8, [#allocation4]
    $region57: #{tpu_custom_call.1} parent=1 // pred_fallthru
      _
    // Predicated region
    $region58: #{tpu_custom_call.1} parent=1 // pred_check
      _
    $region59: #{tpu_custom_call.1} parent=1 // pred_check_branch
      %390 = sbr.rel (0) target = $region61
    $region60: #{tpu_custom_call.1} parent=1 // pred_region
      %391 = dma.done [#allocation4], 128
    $region61: #{tpu_custom_call.1} parent=1 // pred_fallthru
      _
    %392 = vsyncpa [#allocation3], 1
    %393 = vsyncpa [#allocation6], 1
    %394 = vsyncpa [#allocation9], 1
    %395 = vsyncpa [#allocation4], 1

</llo_original>
